<compile_context>
chip_gen: v7x
topology: tpu7x:2x2x1
jax: 0.10.0
libtpu: 0.0.40
codegen_flags: <defaults>
</compile_context>

<pallas_src>
import functools

import jax
import jax.numpy as jnp
from jax.experimental import pallas as pl
from jax.experimental.pallas import tpu as pltpu

LANE = 128


def _round_up(x, m):
    return (x + m - 1) // m * m


def _vmem_capacity_bytes():
    """Per-generation VMEM capacity (v5e/v6e 128 MiB, v7x 64 MiB/TC)."""
    try:
        info = pltpu.get_tpu_info()
        cap = getattr(info, "vmem_capacity_bytes", None)
        if cap:
            return int(cap)
    except Exception:
        pass
    return 64 * 1024 * 1024  # conservative fallback (v7x per-TC)


# ---------------------------------------------------------------------------
# Fused path: both GCN layers in one kernel, everything resident in VMEM.
# ---------------------------------------------------------------------------
def fused_gcn_kernel(a_ref, x_ref, w1_ref, b1_ref, w2_ref, b2_ref, o_ref):
    # Layer 1: H = relu(A_hat @ (X @ W1) + b1)   -- XW1 computed exactly once.
    xw1 = jnp.dot(x_ref[...], w1_ref[...], preferred_element_type=jnp.float32)
    h = jnp.dot(a_ref[...], xw1.astype(a_ref.dtype),
                preferred_element_type=jnp.float32) + b1_ref[...]
    h = jnp.maximum(h, 0.0)
    # Layer 2: out = A_hat @ (H @ W2) + b2
    hw2 = jnp.dot(h.astype(w2_ref.dtype), w2_ref[...],
                  preferred_element_type=jnp.float32)
    out = jnp.dot(a_ref[...], hw2.astype(a_ref.dtype),
                  preferred_element_type=jnp.float32) + b2_ref[...]
    o_ref[...] = out.astype(o_ref.dtype)


def fused_gcn(a_bf, x_bf, w1_bf, b1_p, w2_bf, b2_p, *, out_dtype, vmem_cap):
    n_pad = a_bf.shape[0]
    fin_p = x_bf.shape[1]
    hid_p = w1_bf.shape[1]
    fout_p = w2_bf.shape[1]

    flops = (2 * n_pad * fin_p * hid_p + 2 * n_pad * n_pad * hid_p
             + 2 * n_pad * hid_p * fout_p + 2 * n_pad * n_pad * fout_p)
    bytes_accessed = (a_bf.size * 2 + x_bf.size * 2 + w1_bf.size * 2
                      + w2_bf.size * 2 + b1_p.size * 4 + b2_p.size * 4
                      + n_pad * fout_p * jnp.dtype(out_dtype).itemsize)

    def full(shape):
        return pl.BlockSpec(shape, lambda i, _nd=len(shape): (0,) * _nd)

    return pl.pallas_call(
        fused_gcn_kernel,
        out_shape=jax.ShapeDtypeStruct((n_pad, fout_p), out_dtype),
        grid_spec=pltpu.PrefetchScalarGridSpec(
            num_scalar_prefetch=0,
            grid=(1,),
            in_specs=[
                full((n_pad, n_pad)),   # A_hat resident (read from HBM once)
                full((n_pad, fin_p)),   # X
                full((fin_p, hid_p)),   # W1
                full((1, hid_p)),       # b1
                full((hid_p, fout_p)),  # W2
                full((1, fout_p)),      # b2
            ],
            out_specs=full((n_pad, fout_p)),
        ),
        compiler_params=pltpu.CompilerParams(
            dimension_semantics=("arbitrary",),
            vmem_limit_bytes=min(int(vmem_cap * 0.75), 96 * 1024 * 1024),
        ),
        cost_estimate=pl.CostEstimate(
            flops=flops, transcendentals=0, bytes_accessed=bytes_accessed),
    )(a_bf, x_bf, w1_bf, b1_p, w2_bf, b2_p)


# ---------------------------------------------------------------------------
# Tiled path (large graphs): XW precomputed once, kept resident; A streamed.
# ---------------------------------------------------------------------------
def feature_matmul_kernel(x_ref, w_ref, o_ref):
    o_ref[...] = jnp.dot(x_ref[...], w_ref[...],
                         preferred_element_type=jnp.float32).astype(o_ref.dtype)


def feature_matmul(x_bf, w_bf, *, out_dtype, tm):
    """XW = X @ W, row-tiled; W resident (feature dims are small)."""
    n_pad, fin_p = x_bf.shape
    fout_p = w_bf.shape[1]
    return pl.pallas_call(
        feature_matmul_kernel,
        out_shape=jax.ShapeDtypeStruct((n_pad, fout_p), out_dtype),
        grid_spec=pltpu.PrefetchScalarGridSpec(
            num_scalar_prefetch=0,
            grid=(n_pad // tm,),
            in_specs=[pl.BlockSpec((tm, fin_p), lambda i: (i, 0)),
                      pl.BlockSpec((fin_p, fout_p), lambda i: (0, 0))],
            out_specs=pl.BlockSpec((tm, fout_p), lambda i: (i, 0)),
        ),
        compiler_params=pltpu.CompilerParams(
            dimension_semantics=("parallel",)),
    )(x_bf, w_bf)


def gcn_layer_tiled_kernel(a_ref, xw_ref, b_ref, o_ref, acc_ref, *,
                           tk, apply_relu):
    """acc[i] += A[i,k] @ XW[k]; finalize = + bias (, ReLU).  XW is resident."""
    k = pl.program_id(1)

    @pl.when(k == 0)
    def _():
        acc_ref[...] = jnp.zeros_like(acc_ref)

    off = pl.multiple_of(k * tk, tk)
    acc_ref[...] += jnp.dot(a_ref[...], xw_ref[pl.ds(off, tk), :],
                            preferred_element_type=jnp.float32)

    @pl.when(k == pl.num_programs(1) - 1)
    def _():
        out = acc_ref[...] + b_ref[...]
        if apply_relu:
            out = jnp.maximum(out, 0.0)
        o_ref[...] = out.astype(o_ref.dtype)


def _pick_tiles(n_pad, fout_p, out_itemsize, vmem_cap):
    """Large A tiles bounded by a per-generation VMEM budget."""
    budget = int(vmem_cap * 0.55)
    resident = n_pad * fout_p * 2 + fout_p * 4            # XW (bf16) + bias
    tm = 512 if n_pad % 512 == 0 else (256 if n_pad % 256 == 0 else 128)
    tm = min(tm, n_pad)
    for tk in (2048, 1024, 512, 256, 128):
        if tk > n_pad or n_pad % tk:
            continue
        need = (2 * tm * tk * 2                 # A tile, double-buffered bf16
                + tm * fout_p * 4               # f32 accumulator
                + 2 * tm * fout_p * out_itemsize  # output, double-buffered
                + resident)
        if need <= budget:
            return tm, tk
    return tm, 128


def gcn_layer_tiled(a_bf, xw_bf, b_f32, *, apply_relu, out_dtype, vmem_cap):
    n_pad = a_bf.shape[0]
    fout_p = xw_bf.shape[1]
    tm, tk = _pick_tiles(n_pad, fout_p, jnp.dtype(out_dtype).itemsize, vmem_cap)
    grid = (n_pad // tm, n_pad // tk)

    flops = 2 * n_pad * n_pad * fout_p
    bytes_accessed = (a_bf.size * 2 + xw_bf.size * 2 + b_f32.size * 4
                      + n_pad * fout_p * jnp.dtype(out_dtype).itemsize)

    return pl.pallas_call(
        functools.partial(gcn_layer_tiled_kernel, tk=tk, apply_relu=apply_relu),
        out_shape=jax.ShapeDtypeStruct((n_pad, fout_p), out_dtype),
        grid_spec=pltpu.PrefetchScalarGridSpec(
            num_scalar_prefetch=0,
            grid=grid,
            in_specs=[
                pl.BlockSpec((tm, tk), lambda i, k: (i, k)),         # A streamed
                pl.BlockSpec((n_pad, fout_p), lambda i, k: (0, 0)),  # XW resident
                pl.BlockSpec((1, fout_p), lambda i, k: (0, 0)),      # bias resident
            ],
            out_specs=pl.BlockSpec((tm, fout_p), lambda i, k: (i, 0)),
            scratch_shapes=[pltpu.VMEM((tm, fout_p), jnp.float32)],
        ),
        compiler_params=pltpu.CompilerParams(
            dimension_semantics=("parallel", "arbitrary"),
            vmem_limit_bytes=min(int(vmem_cap * 0.75), 96 * 1024 * 1024),
        ),
        cost_estimate=pl.CostEstimate(
            flops=flops, transcendentals=0, bytes_accessed=bytes_accessed),
    )(a_bf, xw_bf, b_f32)


# ---------------------------------------------------------------------------
# Adjacency + forward wrapper
# ---------------------------------------------------------------------------
def build_gcn_adjacency(edge_index, num_nodes, n_pad=None, dtype=jnp.float32):
    """Dense normalized A_hat = D^{-1/2}(A + I)D^{-1/2}, built directly at the
    padded size and in the kernel dtype (padded rows/cols stay exactly zero)."""
    if n_pad is None:
        n_pad = num_nodes
    src = edge_index[0]
    dst = edge_index[1]
    a = jnp.zeros((n_pad, n_pad), dtype=jnp.float32)
    a = a.at[dst, src].add(1.0)                                   # A[dst, src] = 1
    diag = jnp.arange(num_nodes)
    a = a.at[diag, diag].add(1.0)                                 # self loops (valid nodes only)
    deg = a.sum(axis=1)
    d_inv_sqrt = jnp.where(deg > 0, jax.lax.rsqrt(deg), 0.0)
    a = a * d_inv_sqrt[:, None] * d_inv_sqrt[None, :]
    return a.astype(dtype)


def gcn_forward(x, edge_index, w1, b1, w2, b2):
    n, fin = x.shape
    hid = w1.shape[1]
    fout = w2.shape[1]

    fin_p = _round_up(fin, LANE)
    hid_p = _round_up(hid, LANE)
    fout_p = _round_up(fout, LANE)

    vmem_cap = _vmem_capacity_bytes()

    # Fused (A-resident) path fits iff A + X + intermediates fit comfortably.
    n_pad128 = _round_up(n, LANE)
    fused_bytes = (n_pad128 * n_pad128 * 2
                   + n_pad128 * (fin_p * 2 + hid_p * 6 + fout_p * 6))
    use_fused = fused_bytes <= int(vmem_cap * 0.45)

    n_pad = n_pad128 if use_fused else _round_up(n, 512)

    a_bf = build_gcn_adjacency(edge_index, n, n_pad, dtype=jnp.bfloat16)

    pad2 = lambda arr, r, c: jnp.pad(
        arr, ((0, r - arr.shape[0]), (0, c - arr.shape[1])))
    x_bf = pad2(x, n_pad, fin_p).astype(jnp.bfloat16)
    w1_bf = pad2(w1, fin_p, hid_p).astype(jnp.bfloat16)
    w2_bf = pad2(w2, hid_p, fout_p).astype(jnp.bfloat16)
    b1_p = jnp.pad(b1, (0, hid_p - hid)).reshape(1, hid_p).astype(jnp.float32)
    b2_p = jnp.pad(b2, (0, fout_p - fout)).reshape(1, fout_p).astype(jnp.float32)

    if use_fused:
        out = fused_gcn(a_bf, x_bf, w1_bf, b1_p, w2_bf, b2_p,
                        out_dtype=jnp.float32, vmem_cap=vmem_cap)
    else:
        tmx = 512 if n_pad % 512 == 0 else 128
        xw1 = feature_matmul(x_bf, w1_bf, out_dtype=jnp.bfloat16, tm=tmx)
        h = gcn_layer_tiled(a_bf, xw1, b1_p, apply_relu=True,
                            out_dtype=jnp.bfloat16, vmem_cap=vmem_cap)
        xw2 = feature_matmul(h, w2_bf, out_dtype=jnp.bfloat16, tm=tmx)
        out = gcn_layer_tiled(a_bf, xw2, b2_p, apply_relu=False,
                              out_dtype=jnp.float32, vmem_cap=vmem_cap)
    return out[:n, :fout]


def glorot(key, shape):
    fan_in, fan_out = shape
    limit = jnp.sqrt(6.0 / (fan_in + fan_out))
    return jax.random.uniform(key, shape, jnp.float32, -limit, limit)


if __name__ == "__main__":
    # Small shapes consistent with GNNModel(input_dim, hidden_dim, output_dim)
    num_nodes = 16
    input_dim = 8
    hidden_dim = 32
    output_dim = 4

    key = jax.random.PRNGKey(0)
    k_x, k_w1, k_w2 = jax.random.split(key, 3)

    # Node features
    x = jax.random.normal(k_x, (num_nodes, input_dim), dtype=jnp.float32)

    # Deterministic small ring + a few chords as edge_index (2, E)
    srcs = list(range(num_nodes)) + [0, 3, 7, 11]
    dsts = [(i + 1) % num_nodes for i in range(num_nodes)] + [8, 12, 2, 5]
    edge_index = jnp.array([srcs, dsts], dtype=jnp.int32)

    # Deterministic parameter init (glorot weights, zero biases), as GCNConv does
    w1 = glorot(k_w1, (input_dim, hidden_dim))
    b1 = jnp.zeros((hidden_dim,), dtype=jnp.float32)
    w2 = glorot(k_w2, (hidden_dim, output_dim))
    b2 = jnp.zeros((output_dim,), dtype=jnp.float32)

    out = gcn_forward(x, edge_index, w1, b1, w2, b2)
    out = jax.block_until_ready(out)

    # Pure-JAX f32 reference (original GNNModel semantics); kernel uses bf16
    # operands with f32 accumulation, so allow a small tolerance.
    a_hat = build_gcn_adjacency(edge_index, num_nodes)   # f32, unpadded
    ref_h = jnp.maximum(a_hat @ (x @ w1) + b1, 0.0)
    ref = a_hat @ (ref_h @ w2) + b2
    assert out.shape == ref.shape
    assert jnp.allclose(out, ref, atol=3e-2, rtol=3e-2), "mismatch vs reference"

    print("KERNEL_OK")
</pallas_src>

<mosaic_0001>
module attributes {stable_mosaic.version = 11 : i64} {
  func.func @fused_gcn_kernel(%arg0: i32, %arg1: memref<128x128xbf16, #tpu.memory_space<vmem>>, %arg2: memref<128x128xbf16, #tpu.memory_space<vmem>>, %arg3: memref<128x128xbf16, #tpu.memory_space<vmem>>, %arg4: memref<1x128xf32, #tpu.memory_space<vmem>>, %arg5: memref<128x128xbf16, #tpu.memory_space<vmem>>, %arg6: memref<1x128xf32, #tpu.memory_space<vmem>>, %arg7: memref<128x128xf32, #tpu.memory_space<vmem>>) attributes {dimension_semantics = [#tpu.dimension_semantics<arbitrary>], iteration_bounds = array<i64: 1>, scalar_prefetch = 0 : i64, scratch_operands = 0 : i64, tpu.core_type = #tpu.core_type<tc>, window_params = [{pipeline_mode = #tpu.pipeline_mode<synchronous>, transform_indices = @transform_0, window_bounds = array<i64: 128, 128>}, {pipeline_mode = #tpu.pipeline_mode<synchronous>, transform_indices = @transform_1, window_bounds = array<i64: 128, 128>}, {pipeline_mode = #tpu.pipeline_mode<synchronous>, transform_indices = @transform_2, window_bounds = array<i64: 128, 128>}, {pipeline_mode = #tpu.pipeline_mode<synchronous>, transform_indices = @transform_3, window_bounds = array<i64: 1, 128>}, {pipeline_mode = #tpu.pipeline_mode<synchronous>, transform_indices = @transform_4, window_bounds = array<i64: 128, 128>}, {pipeline_mode = #tpu.pipeline_mode<synchronous>, transform_indices = @transform_5, window_bounds = array<i64: 1, 128>}, {pipeline_mode = #tpu.pipeline_mode<synchronous>, transform_indices = @transform_6, window_bounds = array<i64: 128, 128>}]} {
    %c0 = arith.constant 0 : index
    %c0_0 = arith.constant 0 : index
    %0 = vector.load %arg2[%c0, %c0_0] : memref<128x128xbf16, #tpu.memory_space<vmem>>, vector<128x128xbf16>
    %c0_1 = arith.constant 0 : index
    %c0_2 = arith.constant 0 : index
    %1 = vector.load %arg3[%c0_1, %c0_2] : memref<128x128xbf16, #tpu.memory_space<vmem>>, vector<128x128xbf16>
    %cst = arith.constant dense<0.000000e+00> : vector<128x128xf32>
    %2 = tpu.matmul %0, %1, %cst {dimension_numbers = #tpu.dot_dimension_numbers<[1], [0], [0], [1], [0, 0, 1, 1], [], []>} : vector<128x128xbf16>, vector<128x128xbf16>, vector<128x128xf32> -> vector<128x128xf32>
    %c0_3 = arith.constant 0 : index
    %c0_4 = arith.constant 0 : index
    %3 = vector.load %arg1[%c0_3, %c0_4] : memref<128x128xbf16, #tpu.memory_space<vmem>>, vector<128x128xbf16>
    %4 = arith.truncf %2 : vector<128x128xf32> to vector<128x128xbf16>
    %cst_5 = arith.constant dense<0.000000e+00> : vector<128x128xf32>
    %5 = tpu.matmul %3, %4, %cst_5 {dimension_numbers = #tpu.dot_dimension_numbers<[1], [0], [0], [1], [0, 0, 1, 1], [], []>} : vector<128x128xbf16>, vector<128x128xbf16>, vector<128x128xf32> -> vector<128x128xf32>
    %c0_6 = arith.constant 0 : index
    %c0_7 = arith.constant 0 : index
    %6 = vector.load %arg4[%c0_6, %c0_7] : memref<1x128xf32, #tpu.memory_space<vmem>>, vector<1x128xf32>
    %7 = vector.broadcast %6 : vector<1x128xf32> to vector<128x128xf32>
    %8 = arith.addf %5, %7 : vector<128x128xf32>
    %cst_8 = arith.constant 0.000000e+00 : f32
    %9 = vector.broadcast %cst_8 : f32 to vector<128x128xf32>
    %10 = arith.maximumf %8, %9 : vector<128x128xf32>
    %11 = arith.truncf %10 : vector<128x128xf32> to vector<128x128xbf16>
    %c0_9 = arith.constant 0 : index
    %c0_10 = arith.constant 0 : index
    %12 = vector.load %arg5[%c0_9, %c0_10] : memref<128x128xbf16, #tpu.memory_space<vmem>>, vector<128x128xbf16>
    %cst_11 = arith.constant dense<0.000000e+00> : vector<128x128xf32>
    %13 = tpu.matmul %11, %12, %cst_11 {dimension_numbers = #tpu.dot_dimension_numbers<[1], [0], [0], [1], [0, 0, 1, 1], [], []>} : vector<128x128xbf16>, vector<128x128xbf16>, vector<128x128xf32> -> vector<128x128xf32>
    %c0_12 = arith.constant 0 : index
    %c0_13 = arith.constant 0 : index
    %14 = vector.load %arg1[%c0_12, %c0_13] : memref<128x128xbf16, #tpu.memory_space<vmem>>, vector<128x128xbf16>
    %15 = arith.truncf %13 : vector<128x128xf32> to vector<128x128xbf16>
    %cst_14 = arith.constant dense<0.000000e+00> : vector<128x128xf32>
    %16 = tpu.matmul %14, %15, %cst_14 {dimension_numbers = #tpu.dot_dimension_numbers<[1], [0], [0], [1], [0, 0, 1, 1], [], []>} : vector<128x128xbf16>, vector<128x128xbf16>, vector<128x128xf32> -> vector<128x128xf32>
    %c0_15 = arith.constant 0 : index
    %c0_16 = arith.constant 0 : index
    %17 = vector.load %arg6[%c0_15, %c0_16] : memref<1x128xf32, #tpu.memory_space<vmem>>, vector<1x128xf32>
    %18 = vector.broadcast %17 : vector<1x128xf32> to vector<128x128xf32>
    %19 = arith.addf %16, %18 : vector<128x128xf32>
    %c0_17 = arith.constant 0 : index
    %c0_18 = arith.constant 0 : index
    %20 = vector.load %arg7[%c0_17, %c0_18] : memref<128x128xf32, #tpu.memory_space<vmem>>, vector<128x128xf32>
    tpu.vector_store %arg7[%c0_17, %c0_18], %19 {strides = array<i32>} : memref<128x128xf32, #tpu.memory_space<vmem>>, vector<128x128xf32>,
    return
  }
  func.func @transform_0(%arg0: i32) -> (i32, i32) {
    %c0_i32 = arith.constant 0 : i32
    %c0_i32_0 = arith.constant 0 : i32
    %c0_i32_1 = arith.constant 0 : i32
    return %c0_i32, %c0_i32_0 : i32, i32
  }
  func.func @transform_1(%arg0: i32) -> (i32, i32) {
    %c0_i32 = arith.constant 0 : i32
    %c0_i32_0 = arith.constant 0 : i32
    %c0_i32_1 = arith.constant 0 : i32
    return %c0_i32, %c0_i32_0 : i32, i32
  }
  func.func @transform_2(%arg0: i32) -> (i32, i32) {
    %c0_i32 = arith.constant 0 : i32
    %c0_i32_0 = arith.constant 0 : i32
    %c0_i32_1 = arith.constant 0 : i32
    return %c0_i32, %c0_i32_0 : i32, i32
  }
  func.func @transform_3(%arg0: i32) -> (i32, i32) {
    %c0_i32 = arith.constant 0 : i32
    %c0_i32_0 = arith.constant 0 : i32
    %c0_i32_1 = arith.constant 0 : i32
    return %c0_i32, %c0_i32_0 : i32, i32
  }
  func.func @transform_4(%arg0: i32) -> (i32, i32) {
    %c0_i32 = arith.constant 0 : i32
    %c0_i32_0 = arith.constant 0 : i32
    %c0_i32_1 = arith.constant 0 : i32
    return %c0_i32, %c0_i32_0 : i32, i32
  }
  func.func @transform_5(%arg0: i32) -> (i32, i32) {
    %c0_i32 = arith.constant 0 : i32
    %c0_i32_0 = arith.constant 0 : i32
    %c0_i32_1 = arith.constant 0 : i32
    return %c0_i32, %c0_i32_0 : i32, i32
  }
  func.func @transform_6(%arg0: i32) -> (i32, i32) {
    %c0_i32 = arith.constant 0 : i32
    %c0_i32_0 = arith.constant 0 : i32
    %c0_i32_1 = arith.constant 0 : i32
    return %c0_i32, %c0_i32_0 : i32, i32
  }
}

</mosaic_0001>

<llo_original>
// kernel: tpu_custom_call.1
$region0: #{tpu_custom_call.1}
  #allocation0 [shape = 'u32[]', space=smem, size = 0x4, offset = 0x4, fixed_abs, tag = 'smem constant byte address 0x4 - core index']
  #allocation1 [shape = 'u32[144,128]{1,0:T(1,128)}', space=vmem, size = 0x12000, scoped, tag = 'internal scratch']
  %s0 = inlined_call_operand.hbm [shape: bf16[128,128], index: 0, kind: input, shape index: {}]
  %s1 = inlined_call_operand.hbm [shape: bf16[128,128], index: 1, kind: input, shape index: {}]
  %s2 = inlined_call_operand.hbm [shape: bf16[128,128], index: 2, kind: input, shape index: {}]
  %s3 = inlined_call_operand.vmem [shape: f32[1,128], index: 3, kind: input, shape index: {}]
  %s4 = inlined_call_operand.hbm [shape: bf16[128,128], index: 4, kind: input, shape index: {}]
  %s5 = inlined_call_operand.vmem [shape: f32[1,128], index: 5, kind: input, shape index: {}]
  %s6 = inlined_call_operand.hbm [shape: f32[128,128], index: 6, kind: output, shape index: {}]
  %s7 = sld [smem:[#allocation0]]
  $region50: #{tpu_custom_call.1} parent=0
    _
  %s9 = ssub.s32 1, %s7
  %s10 = scalar_select 0, %s9, %s7
  $region1: #{tpu_custom_call.1} parent=0
    #allocation2 [shape = 'u8[32768]{0}', space=vmem, size = 0x8000, scoped, tag = 'input window, operand 0, single buffered']
    #allocation3 [shape = 's32[1]{0}', space=sflag, size = 0x4, scoped, tag = 'scoped memory for tpu_custom_call.1']
    #allocation4 [shape = 's32[1]{0}', space=sflag, size = 0x4, scoped, tag = 'scoped memory for tpu_custom_call.1']
    #allocation5 [shape = 'u8[32768]{0}', space=vmem, size = 0x8000, scoped, tag = 'input window, operand 1, single buffered']
    #allocation6 [shape = 's32[1]{0}', space=sflag, size = 0x4, scoped, tag = 'scoped memory for tpu_custom_call.1']
    #allocation7 [shape = 'u8[32768]{0}', space=vmem, size = 0x8000, scoped, tag = 'input window, operand 2, single buffered']
    #allocation8 [shape = 'u8[32768]{0}', space=vmem, size = 0x8000, scoped, tag = 'input window, operand 4, single buffered']
    #allocation9 [shape = 's32[1]{0}', space=sflag, size = 0x4, scoped, tag = 'scoped memory for tpu_custom_call.1']
    #allocation10 [shape = 'u8[65536]{0}', space=vmem, size = 0x10000, scoped, tag = 'output window, operand 0, single buffered']
    %11 = vsyncpa [#allocation3], 0
    %12 = vsyncpa [#allocation6], 0
    %13 = vsyncpa [#allocation9], 0
    %14 = vsyncpa [#allocation4], 0
    // Predicated region
    $region2: #{tpu_custom_call.1} parent=1 // pred_check
      _
    $region3: #{tpu_custom_call.1} parent=1 // pred_check_branch
      %16 = sbr.rel (0) target = $region5
    $region4: #{tpu_custom_call.1} parent=1 // pred_region
      %s18 = ssub.s32 1024, 1024
      %19 = vsyncadd [#allocation3], %s18
      %s20 = sshll.u32 [#allocation2], 4
      %s21 = int_to_ptr.vmem [resolvable:$true] %s20
      %26 = dma.hbm_to_vmem [thread:$0]  %s0, 1024, %s21, [#allocation3], 64, 64, 4
    $region5: #{tpu_custom_call.1} parent=1 // pred_fallthru
      _
    // Predicated region
    $region6: #{tpu_custom_call.1} parent=1 // pred_check
      _
    $region7: #{tpu_custom_call.1} parent=1 // pred_check_branch
      %28 = sbr.rel (0) target = $region9
    $region8: #{tpu_custom_call.1} parent=1 // pred_region
      %s30 = ssub.s32 1024, 1024
      %31 = vsyncadd [#allocation6], %s30
      %s32 = sshll.u32 [#allocation5], 4
      %s33 = int_to_ptr.vmem [resolvable:$true] %s32
      %38 = dma.hbm_to_vmem [thread:$0]  %s1, 1024, %s33, [#allocation6], 64, 64, 4
    $region9: #{tpu_custom_call.1} parent=1 // pred_fallthru
      _
    // Predicated region
    $region10: #{tpu_custom_call.1} parent=1 // pred_check
      _
    $region11: #{tpu_custom_call.1} parent=1 // pred_check_branch
      %40 = sbr.rel (0) target = $region13
    $region12: #{tpu_custom_call.1} parent=1 // pred_region
      %s42 = ssub.s32 1024, 1024
      %43 = vsyncadd [#allocation6], %s42
      %s44 = sshll.u32 [#allocation7], 4
      %s45 = int_to_ptr.vmem [resolvable:$true] %s44
      %50 = dma.hbm_to_vmem [thread:$0]  %s2, 1024, %s45, [#allocation6], 64, 64, 4
    $region13: #{tpu_custom_call.1} parent=1 // pred_fallthru
      _
    // Predicated region
    $region14: #{tpu_custom_call.1} parent=1 // pred_check
      _
    $region15: #{tpu_custom_call.1} parent=1 // pred_check_branch
      %52 = sbr.rel (0) target = $region17
    $region16: #{tpu_custom_call.1} parent=1 // pred_region
      _
    $region17: #{tpu_custom_call.1} parent=1 // pred_fallthru
      _
    // Predicated region
    $region18: #{tpu_custom_call.1} parent=1 // pred_check
      _
    $region19: #{tpu_custom_call.1} parent=1 // pred_check_branch
      %54 = sbr.rel (0) target = $region21
    $region20: #{tpu_custom_call.1} parent=1 // pred_region
      %s56 = ssub.s32 1024, 1024
      %57 = vsyncadd [#allocation9], %s56
      %s58 = sshll.u32 [#allocation8], 4
      %s59 = int_to_ptr.vmem [resolvable:$true] %s58
      %64 = dma.hbm_to_vmem [thread:$0]  %s4, 1024, %s59, [#allocation9], 64, 64, 4
    $region21: #{tpu_custom_call.1} parent=1 // pred_fallthru
      _
    // Predicated region
    $region22: #{tpu_custom_call.1} parent=1 // pred_check
      _
    $region23: #{tpu_custom_call.1} parent=1 // pred_check_branch
      %66 = sbr.rel (0) target = $region25
    $region24: #{tpu_custom_call.1} parent=1 // pred_region
      _
    $region25: #{tpu_custom_call.1} parent=1 // pred_fallthru
      _
    // Predicated region
    $region26: #{tpu_custom_call.1} parent=1 // pred_check
      _
    $region27: #{tpu_custom_call.1} parent=1 // pred_check_branch
      %68 = sbr.rel (0) target = $region29
    $region28: #{tpu_custom_call.1} parent=1 // pred_region
      %69 = dma.done [#allocation3], 1024
    $region29: #{tpu_custom_call.1} parent=1 // pred_fallthru
      _
    // Predicated region
    $region30: #{tpu_custom_call.1} parent=1 // pred_check
      _
    $region31: #{tpu_custom_call.1} parent=1 // pred_check_branch
      %71 = sbr.rel (0) target = $region33
    $region32: #{tpu_custom_call.1} parent=1 // pred_region
      %72 = dma.done [#allocation6], 1024
    $region33: #{tpu_custom_call.1} parent=1 // pred_fallthru
      _
    // Predicated region
    $region34: #{tpu_custom_call.1} parent=1 // pred_check
      _
    $region35: #{tpu_custom_call.1} parent=1 // pred_check_branch
      %74 = sbr.rel (0) target = $region37
    $region36: #{tpu_custom_call.1} parent=1 // pred_region
      %75 = dma.done [#allocation6], 1024
    $region37: #{tpu_custom_call.1} parent=1 // pred_fallthru
      _
    // Predicated region
    $region38: #{tpu_custom_call.1} parent=1 // pred_check
      _
    $region39: #{tpu_custom_call.1} parent=1 // pred_check_branch
      %77 = sbr.rel (0) target = $region41
    $region40: #{tpu_custom_call.1} parent=1 // pred_region
      %78 = dma.done [#allocation9], 1024
    $region41: #{tpu_custom_call.1} parent=1 // pred_fallthru
      _
    %v80 = vld [vmem:[#allocation5] sm:$0xf]
    %v81 = vld [vmem:[#allocation5 + $0x4] sm:$0xf]
    %v82 = vld [vmem:[#allocation5 + $0x8] sm:$0xf]
    %v83 = vld [vmem:[#allocation5 + $0xc] sm:$0xf]
    %v84 = vld [vmem:[#allocation5 + $0x10] sm:$0xf]
    %v85 = vld [vmem:[#allocation5 + $0x14] sm:$0xf]
    %v86 = vld [vmem:[#allocation5 + $0x18] sm:$0xf]
    %v87 = vld [vmem:[#allocation5 + $0x1c] sm:$0xf]
    %v88 = vld [vmem:[#allocation5 + $0x20] sm:$0xf]
    %v89 = vld [vmem:[#allocation5 + $0x24] sm:$0xf]
    %v90 = vld [vmem:[#allocation5 + $0x28] sm:$0xf]
    %v91 = vld [vmem:[#allocation5 + $0x2c] sm:$0xf]
    %v92 = vld [vmem:[#allocation5 + $0x30] sm:$0xf]
    %v93 = vld [vmem:[#allocation5 + $0x34] sm:$0xf]
    %v94 = vld [vmem:[#allocation5 + $0x38] sm:$0xf]
    %v95 = vld [vmem:[#allocation5 + $0x3c] sm:$0xf]
    %v96 = vld [vmem:[#allocation7] sm:$0xf]
    %v97 = vld [vmem:[#allocation7 + $0x4] sm:$0xf]
    %v98 = vld [vmem:[#allocation7 + $0x8] sm:$0xf]
    %v99 = vld [vmem:[#allocation7 + $0xc] sm:$0xf]
    %v100 = vld [vmem:[#allocation7 + $0x10] sm:$0xf]
    %v101 = vld [vmem:[#allocation7 + $0x14] sm:$0xf]
    %v102 = vld [vmem:[#allocation7 + $0x18] sm:$0xf]
    %v103 = vld [vmem:[#allocation7 + $0x1c] sm:$0xf]
    %v104 = vld [vmem:[#allocation7 + $0x20] sm:$0xf]
    %v105 = vld [vmem:[#allocation7 + $0x24] sm:$0xf]
    %v106 = vld [vmem:[#allocation7 + $0x28] sm:$0xf]
    %v107 = vld [vmem:[#allocation7 + $0x2c] sm:$0xf]
    %v108 = vld [vmem:[#allocation7 + $0x30] sm:$0xf]
    %v109 = vld [vmem:[#allocation7 + $0x34] sm:$0xf]
    %v110 = vld [vmem:[#allocation7 + $0x38] sm:$0xf]
    %v111 = vld [vmem:[#allocation7 + $0x3c] sm:$0xf]
    %v128 = vunpack.c.l.b16 %v80
    %v129 = vunpack.c.l.b16 %v81
    %v130 = vunpack.c.l.b16 %v82
    %v131 = vunpack.c.l.b16 %v83
    %v132 = vunpack.c.l.b16 %v84
    %v133 = vunpack.c.l.b16 %v85
    %v134 = vunpack.c.l.b16 %v86
    %v135 = vunpack.c.l.b16 %v87
    %v136 = vunpack.c.l.b16 %v88
    %v137 = vunpack.c.l.b16 %v89
    %v138 = vunpack.c.l.b16 %v90
    %v139 = vunpack.c.l.b16 %v91
    %v140 = vunpack.c.l.b16 %v92
    %v141 = vunpack.c.l.b16 %v93
    %v142 = vunpack.c.l.b16 %v94
    %v143 = vunpack.c.l.b16 %v95
    %v144 = vpack.c.b16 %v129, %v128
    %v145 = vpack.c.b16 %v131, %v130
    %v146 = vpack.c.b16 %v133, %v132
    %v147 = vpack.c.b16 %v135, %v134
    %v148 = vpack.c.b16 %v137, %v136
    %v149 = vpack.c.b16 %v139, %v138
    %v150 = vpack.c.b16 %v141, %v140
    %v151 = vpack.c.b16 %v143, %v142
    %v176 = vunpack.c.l.b16 %v96
    %v177 = vunpack.c.l.b16 %v97
    %v178 = vunpack.c.l.b16 %v98
    %v179 = vunpack.c.l.b16 %v99
    %v180 = vunpack.c.l.b16 %v100
    %v181 = vunpack.c.l.b16 %v101
    %v182 = vunpack.c.l.b16 %v102
    %v183 = vunpack.c.l.b16 %v103
    %v184 = vunpack.c.l.b16 %v104
    %v185 = vunpack.c.l.b16 %v105
    %v186 = vunpack.c.l.b16 %v106
    %v187 = vunpack.c.l.b16 %v107
    %v188 = vunpack.c.l.b16 %v108
    %v189 = vunpack.c.l.b16 %v109
    %v190 = vunpack.c.l.b16 %v110
    %v191 = vunpack.c.l.b16 %v111
    %v192 = vpack.c.b16 %v177, %v176
    %v193 = vpack.c.b16 %v179, %v178
    %v194 = vpack.c.b16 %v181, %v180
    %v195 = vpack.c.b16 %v183, %v182
    %v196 = vpack.c.b16 %v185, %v184
    %v197 = vpack.c.b16 %v187, %v186
    %v198 = vpack.c.b16 %v189, %v188
    %v199 = vpack.c.b16 %v191, %v190
    %208 = vmatprep.subr.bf16.mxu0 0
    %209 = vmatpush1.bf16.msra.mxu0 %v192
    %210 = vmatprep.subr.bf16.mxu0 0
    %211 = vmatpush1.bf16.msra.mxu0 %v193
    %212 = vmatprep.subr.bf16.mxu0 0
    %213 = vmatpush1.bf16.msra.mxu0 %v194
    %214 = vmatprep.subr.bf16.mxu0 0
    %215 = vmatpush1.bf16.msra.mxu0 %v195
    %216 = vmatprep.subr.bf16.mxu0 0
    %217 = vmatpush1.bf16.msra.mxu0 %v196
    %218 = vmatprep.subr.bf16.mxu0 0
    %219 = vmatpush1.bf16.msra.mxu0 %v197
    %220 = vmatprep.subr.bf16.mxu0 0
    %221 = vmatpush1.bf16.msra.mxu0 %v198
    %222 = vmatprep.subr.bf16.mxu0 0
    %223 = vmatpush1.bf16.msra.mxu0 %v199
    %224 = vmatprep.subr.bf16.mxu0 0
    %225 = vmatpush1.bf16.msra.mxu0 0
    %226 = vmatprep.subr.bf16.mxu0 0
    %227 = vmatpush1.bf16.msra.mxu0 0
    %228 = vmatprep.subr.bf16.mxu0 0
    %229 = vmatpush1.bf16.msra.mxu0 0
    %230 = vmatprep.subr.bf16.mxu0 0
    %231 = vmatpush1.bf16.msra.mxu0 0
    %232 = vmatprep.subr.bf16.mxu0 0
    %233 = vmatpush1.bf16.msra.mxu0 0
    %234 = vmatprep.subr.bf16.mxu0 0
    %235 = vmatpush1.bf16.msra.mxu0 0
    %236 = vmatprep.subr.bf16.mxu0 0
    %237 = vmatpush1.bf16.msra.mxu0 0
    %238 = vmatprep.subr.bf16.mxu0 0
    %239 = vmatpush1.bf16.msra.mxu0 0
    %240 = vmatprep.mubr.bf16.mxu0 0
    %241 = vmatmul.mubr.bf16.gmra.mrb[0].mxu0 %v144
    %v242 = vpop.f32.mrb[0].mxu0
    %v243 = vadd.f32 0.0, %v242
    %v244 = vpop.f32.mrb[0].mxu0
    %v245 = vpop.f32.mrb[0].mxu0
    %v246 = vadd.f32 0.0, %v245
    %v247 = vpop.f32.mrb[0].mxu0
    %248 = vmatprep.mubr.bf16.mxu0 0
    %249 = vmatmul.mubr.bf16.gmra.mrb[0].mxu0 %v145
    %v250 = vpop.f32.mrb[0].mxu0
    %v251 = vadd.f32 0.0, %v250
    %v252 = vpop.f32.mrb[0].mxu0
    %v253 = vpop.f32.mrb[0].mxu0
    %v254 = vadd.f32 0.0, %v253
    %v255 = vpop.f32.mrb[0].mxu0
    %256 = vmatprep.mubr.bf16.mxu0 0
    %257 = vmatmul.mubr.bf16.gmra.mrb[0].mxu0 %v146
    %v258 = vpop.f32.mrb[0].mxu0
    %v259 = vadd.f32 0.0, %v258
    %v260 = vpop.f32.mrb[0].mxu0
    %v261 = vpop.f32.mrb[0].mxu0
    %v262 = vadd.f32 0.0, %v261
    %v263 = vpop.f32.mrb[0].mxu0
    %264 = vmatprep.mubr.bf16.mxu0 0
    %265 = vmatmul.mubr.bf16.gmra.mrb[0].mxu0 %v147
    %v266 = vpop.f32.mrb[0].mxu0
    %v267 = vadd.f32 0.0, %v266
    %v268 = vpop.f32.mrb[0].mxu0
    %v269 = vpop.f32.mrb[0].mxu0
    %v270 = vadd.f32 0.0, %v269
    %v271 = vpop.f32.mrb[0].mxu0
    %272 = vmatprep.mubr.bf16.mxu0 0
    %273 = vmatmul.mubr.bf16.gmra.mrb[0].mxu0 %v148
    %v274 = vpop.f32.mrb[0].mxu0
    %v275 = vadd.f32 0.0, %v274
    %v276 = vpop.f32.mrb[0].mxu0
    %v277 = vpop.f32.mrb[0].mxu0
    %v278 = vadd.f32 0.0, %v277
    %v279 = vpop.f32.mrb[0].mxu0
    %280 = vmatprep.mubr.bf16.mxu0 0
    %281 = vmatmul.mubr.bf16.gmra.mrb[0].mxu0 %v149
    %v282 = vpop.f32.mrb[0].mxu0
    %v283 = vadd.f32 0.0, %v282
    %v284 = vpop.f32.mrb[0].mxu0
    %v285 = vpop.f32.mrb[0].mxu0
    %v286 = vadd.f32 0.0, %v285
    %v287 = vpop.f32.mrb[0].mxu0
    %288 = vmatprep.mubr.bf16.mxu0 0
    %289 = vmatmul.mubr.bf16.gmra.mrb[0].mxu0 %v150
    %v290 = vpop.f32.mrb[0].mxu0
    %v291 = vadd.f32 0.0, %v290
    %v292 = vpop.f32.mrb[0].mxu0
    %v293 = vpop.f32.mrb[0].mxu0
    %v294 = vadd.f32 0.0, %v293
    %v295 = vpop.f32.mrb[0].mxu0
    %296 = vmatprep.mubr.bf16.mxu0 0
    %297 = vmatmul.mubr.bf16.gmra.mrb[0].mxu0 %v151
    %v298 = vpop.f32.mrb[0].mxu0
    %v299 = vadd.f32 0.0, %v298
    %v300 = vpop.f32.mrb[0].mxu0
    %v301 = vpop.f32.mrb[0].mxu0
    %v302 = vadd.f32 0.0, %v301
    %v303 = vpop.f32.mrb[0].mxu0
    %304 = vdwg.mxu0
    %v305 = vld [vmem:[#allocation2] sm:$0xf]
    %v306 = vld [vmem:[#allocation2 + $0x4] sm:$0xf]
    %v307 = vld [vmem:[#allocation2 + $0x8] sm:$0xf]
    %v308 = vld [vmem:[#allocation2 + $0xc] sm:$0xf]
    %v309 = vld [vmem:[#allocation2 + $0x10] sm:$0xf]
    %v310 = vld [vmem:[#allocation2 + $0x14] sm:$0xf]
    %v311 = vld [vmem:[#allocation2 + $0x18] sm:$0xf]
    %v312 = vld [vmem:[#allocation2 + $0x1c] sm:$0xf]
    %v313 = vld [vmem:[#allocation2 + $0x20] sm:$0xf]
    %v314 = vld [vmem:[#allocation2 + $0x24] sm:$0xf]
    %v315 = vld [vmem:[#allocation2 + $0x28] sm:$0xf]
    %v316 = vld [vmem:[#allocation2 + $0x2c] sm:$0xf]
    %v317 = vld [vmem:[#allocation2 + $0x30] sm:$0xf]
    %v318 = vld [vmem:[#allocation2 + $0x34] sm:$0xf]
    %v319 = vld [vmem:[#allocation2 + $0x38] sm:$0xf]
    %v320 = vld [vmem:[#allocation2 + $0x3c] sm:$0xf]
    %v321 = vpack.c.bf16 %v246, %v243
    %v322 = vpack.c.bf16 %v254, %v251
    %v323 = vpack.c.bf16 %v262, %v259
    %v324 = vpack.c.bf16 %v270, %v267
    %v325 = vpack.c.bf16 %v278, %v275
    %v326 = vpack.c.bf16 %v286, %v283
    %v327 = vpack.c.bf16 %v294, %v291
    %v328 = vpack.c.bf16 %v302, %v299
    %v329 = vld [vmem:[%s3] sm:$0x1]
    %v331 = vlaneseq
    %v332 = vshrl.u32 %v331, 7
    %v333 = vsub.s32 0, %v332
    %v334 = vrot.slane %v329, %v333
    %v352 = vunpack.c.l.b16 %v305
    %v353 = vunpack.c.l.b16 %v306
    %v354 = vunpack.c.l.b16 %v307
    %v355 = vunpack.c.l.b16 %v308
    %v356 = vunpack.c.l.b16 %v309
    %v357 = vunpack.c.l.b16 %v310
    %v358 = vunpack.c.l.b16 %v311
    %v359 = vunpack.c.l.b16 %v312
    %v360 = vunpack.c.l.b16 %v313
    %v361 = vunpack.c.l.b16 %v314
    %v362 = vunpack.c.l.b16 %v315
    %v363 = vunpack.c.l.b16 %v316
    %v364 = vunpack.c.l.b16 %v317
    %v365 = vunpack.c.l.b16 %v318
    %v366 = vunpack.c.l.b16 %v319
    %v367 = vunpack.c.l.b16 %v320
    %v368 = vpack.c.b16 %v353, %v352
    %v369 = vpack.c.b16 %v355, %v354
    %v370 = vpack.c.b16 %v357, %v356
    %v371 = vpack.c.b16 %v359, %v358
    %v372 = vpack.c.b16 %v361, %v360
    %v373 = vpack.c.b16 %v363, %v362
    %v374 = vpack.c.b16 %v365, %v364
    %v375 = vpack.c.b16 %v367, %v366
    %384 = vmatprep.subr.bf16.mxu0 0
    %385 = vmatpush1.bf16.msra.mxu0 %v321
    %386 = vmatprep.subr.bf16.mxu0 0
    %387 = vmatpush1.bf16.msra.mxu0 %v322
    %388 = vmatprep.subr.bf16.mxu0 0
    %389 = vmatpush1.bf16.msra.mxu0 %v323
    %390 = vmatprep.subr.bf16.mxu0 0
    %391 = vmatpush1.bf16.msra.mxu0 %v324
    %392 = vmatprep.subr.bf16.mxu0 0
    %393 = vmatpush1.bf16.msra.mxu0 %v325
    %394 = vmatprep.subr.bf16.mxu0 0
    %395 = vmatpush1.bf16.msra.mxu0 %v326
    %396 = vmatprep.subr.bf16.mxu0 0
    %397 = vmatpush1.bf16.msra.mxu0 %v327
    %398 = vmatprep.subr.bf16.mxu0 0
    %399 = vmatpush1.bf16.msra.mxu0 %v328
    %400 = vmatprep.subr.bf16.mxu0 0
    %401 = vmatpush1.bf16.msra.mxu0 0
    %402 = vmatprep.subr.bf16.mxu0 0
    %403 = vmatpush1.bf16.msra.mxu0 0
    %404 = vmatprep.subr.bf16.mxu0 0
    %405 = vmatpush1.bf16.msra.mxu0 0
    %406 = vmatprep.subr.bf16.mxu0 0
    %407 = vmatpush1.bf16.msra.mxu0 0
    %408 = vmatprep.subr.bf16.mxu0 0
    %409 = vmatpush1.bf16.msra.mxu0 0
    %410 = vmatprep.subr.bf16.mxu0 0
    %411 = vmatpush1.bf16.msra.mxu0 0
    %412 = vmatprep.subr.bf16.mxu0 0
    %413 = vmatpush1.bf16.msra.mxu0 0
    %414 = vmatprep.subr.bf16.mxu0 0
    %415 = vmatpush1.bf16.msra.mxu0 0
    %416 = vmatprep.mubr.bf16.mxu0 0
    %417 = vmatmul.mubr.bf16.gmra.mrb[0].mxu0 %v368
    %v418 = vpop.f32.mrb[0].mxu0
    %v419 = vadd.f32 %v334, %v418
    %v420 = vpop.f32.mrb[0].mxu0
    %v421 = vpop.f32.mrb[0].mxu0
    %v422 = vadd.f32 %v334, %v421
    %v423 = vpop.f32.mrb[0].mxu0
    %424 = vmatprep.mubr.bf16.mxu0 0
    %425 = vmatmul.mubr.bf16.gmra.mrb[0].mxu0 %v369
    %v426 = vpop.f32.mrb[0].mxu0
    %v427 = vadd.f32 %v334, %v426
    %v428 = vpop.f32.mrb[0].mxu0
    %v429 = vpop.f32.mrb[0].mxu0
    %v430 = vadd.f32 %v334, %v429
    %v431 = vpop.f32.mrb[0].mxu0
    %432 = vmatprep.mubr.bf16.mxu0 0
    %433 = vmatmul.mubr.bf16.gmra.mrb[0].mxu0 %v370
    %v434 = vpop.f32.mrb[0].mxu0
    %v435 = vadd.f32 %v334, %v434
    %v436 = vpop.f32.mrb[0].mxu0
    %v437 = vpop.f32.mrb[0].mxu0
    %v438 = vadd.f32 %v334, %v437
    %v439 = vpop.f32.mrb[0].mxu0
    %440 = vmatprep.mubr.bf16.mxu0 0
    %441 = vmatmul.mubr.bf16.gmra.mrb[0].mxu0 %v371
    %v442 = vpop.f32.mrb[0].mxu0
    %v443 = vadd.f32 %v334, %v442
    %v444 = vpop.f32.mrb[0].mxu0
    %v445 = vpop.f32.mrb[0].mxu0
    %v446 = vadd.f32 %v334, %v445
    %v447 = vpop.f32.mrb[0].mxu0
    %448 = vmatprep.mubr.bf16.mxu0 0
    %449 = vmatmul.mubr.bf16.gmra.mrb[0].mxu0 %v372
    %v450 = vpop.f32.mrb[0].mxu0
    %v451 = vadd.f32 %v334, %v450
    %v452 = vpop.f32.mrb[0].mxu0
    %v453 = vpop.f32.mrb[0].mxu0
    %v454 = vadd.f32 %v334, %v453
    %v455 = vpop.f32.mrb[0].mxu0
    %456 = vmatprep.mubr.bf16.mxu0 0
    %457 = vmatmul.mubr.bf16.gmra.mrb[0].mxu0 %v373
    %v458 = vpop.f32.mrb[0].mxu0
    %v459 = vadd.f32 %v334, %v458
    %v460 = vpop.f32.mrb[0].mxu0
    %v461 = vpop.f32.mrb[0].mxu0
    %v462 = vadd.f32 %v334, %v461
    %v463 = vpop.f32.mrb[0].mxu0
    %464 = vmatprep.mubr.bf16.mxu0 0
    %465 = vmatmul.mubr.bf16.gmra.mrb[0].mxu0 %v374
    %v466 = vpop.f32.mrb[0].mxu0
    %v467 = vadd.f32 %v334, %v466
    %v468 = vpop.f32.mrb[0].mxu0
    %v469 = vpop.f32.mrb[0].mxu0
    %v470 = vadd.f32 %v334, %v469
    %v471 = vpop.f32.mrb[0].mxu0
    %472 = vmatprep.mubr.bf16.mxu0 0
    %473 = vmatmul.mubr.bf16.gmra.mrb[0].mxu0 %v375
    %v474 = vpop.f32.mrb[0].mxu0
    %v475 = vadd.f32 %v334, %v474
    %v476 = vpop.f32.mrb[0].mxu0
    %v477 = vpop.f32.mrb[0].mxu0
    %v478 = vadd.f32 %v334, %v477
    %v479 = vpop.f32.mrb[0].mxu0
    %480 = vdwg.mxu0
    %v481 = vmax.f32 %v419, 0.0
    %v482 = vmax.f32 %v422, 0.0
    %v483 = vmax.f32 %v427, 0.0
    %v484 = vmax.f32 %v430, 0.0
    %v485 = vmax.f32 %v435, 0.0
    %v486 = vmax.f32 %v438, 0.0
    %v487 = vmax.f32 %v443, 0.0
    %v488 = vmax.f32 %v446, 0.0
    %v489 = vmax.f32 %v451, 0.0
    %v490 = vmax.f32 %v454, 0.0
    %v491 = vmax.f32 %v459, 0.0
    %v492 = vmax.f32 %v462, 0.0
    %v493 = vmax.f32 %v467, 0.0
    %v494 = vmax.f32 %v470, 0.0
    %v495 = vmax.f32 %v475, 0.0
    %v496 = vmax.f32 %v478, 0.0
    %v497 = vpack.c.bf16 %v482, %v481
    %v498 = vpack.c.bf16 %v484, %v483
    %v499 = vpack.c.bf16 %v486, %v485
    %v500 = vpack.c.bf16 %v488, %v487
    %v501 = vpack.c.bf16 %v490, %v489
    %v502 = vpack.c.bf16 %v492, %v491
    %v503 = vpack.c.bf16 %v494, %v493
    %v504 = vpack.c.bf16 %v496, %v495
    %v505 = vld [vmem:[#allocation8] sm:$0xf]
    %v506 = vld [vmem:[#allocation8 + $0x4] sm:$0xf]
    %v507 = vld [vmem:[#allocation8 + $0x8] sm:$0xf]
    %v508 = vld [vmem:[#allocation8 + $0xc] sm:$0xf]
    %v509 = vld [vmem:[#allocation8 + $0x10] sm:$0xf]
    %v510 = vld [vmem:[#allocation8 + $0x14] sm:$0xf]
    %v511 = vld [vmem:[#allocation8 + $0x18] sm:$0xf]
    %v512 = vld [vmem:[#allocation8 + $0x1c] sm:$0xf]
    %v513 = vld [vmem:[#allocation8 + $0x20] sm:$0xf]
    %v514 = vld [vmem:[#allocation8 + $0x24] sm:$0xf]
    %v515 = vld [vmem:[#allocation8 + $0x28] sm:$0xf]
    %v516 = vld [vmem:[#allocation8 + $0x2c] sm:$0xf]
    %v517 = vld [vmem:[#allocation8 + $0x30] sm:$0xf]
    %v518 = vld [vmem:[#allocation8 + $0x34] sm:$0xf]
    %v519 = vld [vmem:[#allocation8 + $0x38] sm:$0xf]
    %v520 = vld [vmem:[#allocation8 + $0x3c] sm:$0xf]
    %v537 = vunpack.c.l.b16 %v505
    %v538 = vunpack.c.l.b16 %v506
    %v539 = vunpack.c.l.b16 %v507
    %v540 = vunpack.c.l.b16 %v508
    %v541 = vunpack.c.l.b16 %v509
    %v542 = vunpack.c.l.b16 %v510
    %v543 = vunpack.c.l.b16 %v511
    %v544 = vunpack.c.l.b16 %v512
    %v545 = vunpack.c.l.b16 %v513
    %v546 = vunpack.c.l.b16 %v514
    %v547 = vunpack.c.l.b16 %v515
    %v548 = vunpack.c.l.b16 %v516
    %v549 = vunpack.c.l.b16 %v517
    %v550 = vunpack.c.l.b16 %v518
    %v551 = vunpack.c.l.b16 %v519
    %v552 = vunpack.c.l.b16 %v520
    %v553 = vpack.c.b16 %v538, %v537
    %v554 = vpack.c.b16 %v540, %v539
    %v555 = vpack.c.b16 %v542, %v541
    %v556 = vpack.c.b16 %v544, %v543
    %v557 = vpack.c.b16 %v546, %v545
    %v558 = vpack.c.b16 %v548, %v547
    %v559 = vpack.c.b16 %v550, %v549
    %v560 = vpack.c.b16 %v552, %v551
    %569 = vmatprep.subr.bf16.mxu0 0
    %570 = vmatpush1.bf16.msra.mxu0 %v553
    %571 = vmatprep.subr.bf16.mxu0 0
    %572 = vmatpush1.bf16.msra.mxu0 %v554
    %573 = vmatprep.subr.bf16.mxu0 0
    %574 = vmatpush1.bf16.msra.mxu0 %v555
    %575 = vmatprep.subr.bf16.mxu0 0
    %576 = vmatpush1.bf16.msra.mxu0 %v556
    %577 = vmatprep.subr.bf16.mxu0 0
    %578 = vmatpush1.bf16.msra.mxu0 %v557
    %579 = vmatprep.subr.bf16.mxu0 0
    %580 = vmatpush1.bf16.msra.mxu0 %v558
    %581 = vmatprep.subr.bf16.mxu0 0
    %582 = vmatpush1.bf16.msra.mxu0 %v559
    %583 = vmatprep.subr.bf16.mxu0 0
    %584 = vmatpush1.bf16.msra.mxu0 %v560
    %585 = vmatprep.subr.bf16.mxu0 0
    %586 = vmatpush1.bf16.msra.mxu0 0
    %587 = vmatprep.subr.bf16.mxu0 0
    %588 = vmatpush1.bf16.msra.mxu0 0
    %589 = vmatprep.subr.bf16.mxu0 0
    %590 = vmatpush1.bf16.msra.mxu0 0
    %591 = vmatprep.subr.bf16.mxu0 0
    %592 = vmatpush1.bf16.msra.mxu0 0
    %593 = vmatprep.subr.bf16.mxu0 0
    %594 = vmatpush1.bf16.msra.mxu0 0
    %595 = vmatprep.subr.bf16.mxu0 0
    %596 = vmatpush1.bf16.msra.mxu0 0
    %597 = vmatprep.subr.bf16.mxu0 0
    %598 = vmatpush1.bf16.msra.mxu0 0
    %599 = vmatprep.subr.bf16.mxu0 0
    %600 = vmatpush1.bf16.msra.mxu0 0
    %601 = vmatprep.mubr.bf16.mxu0 0
    %602 = vmatmul.mubr.bf16.gmra.mrb[0].mxu0 %v497
    %v603 = vpop.f32.mrb[0].mxu0
    %v604 = vadd.f32 0.0, %v603
    %v605 = vpop.f32.mrb[0].mxu0
    %v606 = vpop.f32.mrb[0].mxu0
    %v607 = vadd.f32 0.0, %v606
    %v608 = vpop.f32.mrb[0].mxu0
    %609 = vmatprep.mubr.bf16.mxu0 0
    %610 = vmatmul.mubr.bf16.gmra.mrb[0].mxu0 %v498
    %v611 = vpop.f32.mrb[0].mxu0
    %v612 = vadd.f32 0.0, %v611
    %v613 = vpop.f32.mrb[0].mxu0
    %v614 = vpop.f32.mrb[0].mxu0
    %v615 = vadd.f32 0.0, %v614
    %v616 = vpop.f32.mrb[0].mxu0
    %617 = vmatprep.mubr.bf16.mxu0 0
    %618 = vmatmul.mubr.bf16.gmra.mrb[0].mxu0 %v499
    %v619 = vpop.f32.mrb[0].mxu0
    %v620 = vadd.f32 0.0, %v619
    %v621 = vpop.f32.mrb[0].mxu0
    %v622 = vpop.f32.mrb[0].mxu0
    %v623 = vadd.f32 0.0, %v622
    %v624 = vpop.f32.mrb[0].mxu0
    %625 = vmatprep.mubr.bf16.mxu0 0
    %626 = vmatmul.mubr.bf16.gmra.mrb[0].mxu0 %v500
    %v627 = vpop.f32.mrb[0].mxu0
    %v628 = vadd.f32 0.0, %v627
    %v629 = vpop.f32.mrb[0].mxu0
    %v630 = vpop.f32.mrb[0].mxu0
    %v631 = vadd.f32 0.0, %v630
    %v632 = vpop.f32.mrb[0].mxu0
    %633 = vmatprep.mubr.bf16.mxu0 0
    %634 = vmatmul.mubr.bf16.gmra.mrb[0].mxu0 %v501
    %v635 = vpop.f32.mrb[0].mxu0
    %v636 = vadd.f32 0.0, %v635
    %v637 = vpop.f32.mrb[0].mxu0
    %v638 = vpop.f32.mrb[0].mxu0
    %v639 = vadd.f32 0.0, %v638
    %v640 = vpop.f32.mrb[0].mxu0
    %641 = vmatprep.mubr.bf16.mxu0 0
    %642 = vmatmul.mubr.bf16.gmra.mrb[0].mxu0 %v502
    %v643 = vpop.f32.mrb[0].mxu0
    %v644 = vadd.f32 0.0, %v643
    %v645 = vpop.f32.mrb[0].mxu0
    %v646 = vpop.f32.mrb[0].mxu0
    %v647 = vadd.f32 0.0, %v646
    %v648 = vpop.f32.mrb[0].mxu0
    %649 = vmatprep.mubr.bf16.mxu0 0
    %650 = vmatmul.mubr.bf16.gmra.mrb[0].mxu0 %v503
    %v651 = vpop.f32.mrb[0].mxu0
    %v652 = vadd.f32 0.0, %v651
    %v653 = vpop.f32.mrb[0].mxu0
    %v654 = vpop.f32.mrb[0].mxu0
    %v655 = vadd.f32 0.0, %v654
    %v656 = vpop.f32.mrb[0].mxu0
    %657 = vmatprep.mubr.bf16.mxu0 0
    %658 = vmatmul.mubr.bf16.gmra.mrb[0].mxu0 %v504
    %v659 = vpop.f32.mrb[0].mxu0
    %v660 = vadd.f32 0.0, %v659
    %v661 = vpop.f32.mrb[0].mxu0
    %v662 = vpop.f32.mrb[0].mxu0
    %v663 = vadd.f32 0.0, %v662
    %v664 = vpop.f32.mrb[0].mxu0
    %665 = vdwg.mxu0
    %v666 = vpack.c.bf16 %v607, %v604
    %v667 = vpack.c.bf16 %v615, %v612
    %v668 = vpack.c.bf16 %v623, %v620
    %v669 = vpack.c.bf16 %v631, %v628
    %v670 = vpack.c.bf16 %v639, %v636
    %v671 = vpack.c.bf16 %v647, %v644
    %v672 = vpack.c.bf16 %v655, %v652
    %v673 = vpack.c.bf16 %v663, %v660
    %v674 = vld [vmem:[%s5] sm:$0x1]
    %v676 = vlaneseq
    %v677 = vshrl.u32 %v676, 7
    %v678 = vsub.s32 0, %v677
    %v679 = vrot.slane %v674, %v678
    %681 = vmatprep.subr.bf16.mxu0 0
    %682 = vmatpush1.bf16.msra.mxu0 %v666
    %683 = vmatprep.subr.bf16.mxu0 0
    %684 = vmatpush1.bf16.msra.mxu0 %v667
    %685 = vmatprep.subr.bf16.mxu0 0
    %686 = vmatpush1.bf16.msra.mxu0 %v668
    %687 = vmatprep.subr.bf16.mxu0 0
    %688 = vmatpush1.bf16.msra.mxu0 %v669
    %689 = vmatprep.subr.bf16.mxu0 0
    %690 = vmatpush1.bf16.msra.mxu0 %v670
    %691 = vmatprep.subr.bf16.mxu0 0
    %692 = vmatpush1.bf16.msra.mxu0 %v671
    %693 = vmatprep.subr.bf16.mxu0 0
    %694 = vmatpush1.bf16.msra.mxu0 %v672
    %695 = vmatprep.subr.bf16.mxu0 0
    %696 = vmatpush1.bf16.msra.mxu0 %v673
    %697 = vmatprep.subr.bf16.mxu0 0
    %698 = vmatpush1.bf16.msra.mxu0 0
    %699 = vmatprep.subr.bf16.mxu0 0
    %700 = vmatpush1.bf16.msra.mxu0 0
    %701 = vmatprep.subr.bf16.mxu0 0
    %702 = vmatpush1.bf16.msra.mxu0 0
    %703 = vmatprep.subr.bf16.mxu0 0
    %704 = vmatpush1.bf16.msra.mxu0 0
    %705 = vmatprep.subr.bf16.mxu0 0
    %706 = vmatpush1.bf16.msra.mxu0 0
    %707 = vmatprep.subr.bf16.mxu0 0
    %708 = vmatpush1.bf16.msra.mxu0 0
    %709 = vmatprep.subr.bf16.mxu0 0
    %710 = vmatpush1.bf16.msra.mxu0 0
    %711 = vmatprep.subr.bf16.mxu0 0
    %712 = vmatpush1.bf16.msra.mxu0 0
    %713 = vmatprep.mubr.bf16.mxu0 0
    %714 = vmatmul.mubr.bf16.gmra.mrb[0].mxu0 %v368
    %v715 = vpop.f32.mrb[0].mxu0
    %v716 = vadd.f32 %v679, %v715
    %v717 = vpop.f32.mrb[0].mxu0
    %v718 = vpop.f32.mrb[0].mxu0
    %v719 = vadd.f32 %v679, %v718
    %v720 = vpop.f32.mrb[0].mxu0
    %721 = vmatprep.mubr.bf16.mxu0 0
    %722 = vmatmul.mubr.bf16.gmra.mrb[0].mxu0 %v369
    %v723 = vpop.f32.mrb[0].mxu0
    %v724 = vadd.f32 %v679, %v723
    %v725 = vpop.f32.mrb[0].mxu0
    %v726 = vpop.f32.mrb[0].mxu0
    %v727 = vadd.f32 %v679, %v726
    %v728 = vpop.f32.mrb[0].mxu0
    %729 = vmatprep.mubr.bf16.mxu0 0
    %730 = vmatmul.mubr.bf16.gmra.mrb[0].mxu0 %v370
    %v731 = vpop.f32.mrb[0].mxu0
    %v732 = vadd.f32 %v679, %v731
    %v733 = vpop.f32.mrb[0].mxu0
    %v734 = vpop.f32.mrb[0].mxu0
    %v735 = vadd.f32 %v679, %v734
    %v736 = vpop.f32.mrb[0].mxu0
    %737 = vmatprep.mubr.bf16.mxu0 0
    %738 = vmatmul.mubr.bf16.gmra.mrb[0].mxu0 %v371
    %v739 = vpop.f32.mrb[0].mxu0
    %v740 = vadd.f32 %v679, %v739
    %v741 = vpop.f32.mrb[0].mxu0
    %v742 = vpop.f32.mrb[0].mxu0
    %v743 = vadd.f32 %v679, %v742
    %v744 = vpop.f32.mrb[0].mxu0
    %745 = vmatprep.mubr.bf16.mxu0 0
    %746 = vmatmul.mubr.bf16.gmra.mrb[0].mxu0 %v372
    %v747 = vpop.f32.mrb[0].mxu0
    %v748 = vadd.f32 %v679, %v747
    %v749 = vpop.f32.mrb[0].mxu0
    %v750 = vpop.f32.mrb[0].mxu0
    %v751 = vadd.f32 %v679, %v750
    %v752 = vpop.f32.mrb[0].mxu0
    %753 = vmatprep.mubr.bf16.mxu0 0
    %754 = vmatmul.mubr.bf16.gmra.mrb[0].mxu0 %v373
    %v755 = vpop.f32.mrb[0].mxu0
    %v756 = vadd.f32 %v679, %v755
    %v757 = vpop.f32.mrb[0].mxu0
    %v758 = vpop.f32.mrb[0].mxu0
    %v759 = vadd.f32 %v679, %v758
    %v760 = vpop.f32.mrb[0].mxu0
    %761 = vmatprep.mubr.bf16.mxu0 0
    %762 = vmatmul.mubr.bf16.gmra.mrb[0].mxu0 %v374
    %v763 = vpop.f32.mrb[0].mxu0
    %v764 = vadd.f32 %v679, %v763
    %v765 = vpop.f32.mrb[0].mxu0
    %v766 = vpop.f32.mrb[0].mxu0
    %v767 = vadd.f32 %v679, %v766
    %v768 = vpop.f32.mrb[0].mxu0
    %769 = vmatprep.mubr.bf16.mxu0 0
    %770 = vmatmul.mubr.bf16.gmra.mrb[0].mxu0 %v375
    %v771 = vpop.f32.mrb[0].mxu0
    %v772 = vadd.f32 %v679, %v771
    %v773 = vpop.f32.mrb[0].mxu0
    %v774 = vpop.f32.mrb[0].mxu0
    %v775 = vadd.f32 %v679, %v774
    %v776 = vpop.f32.mrb[0].mxu0
    %777 = vdwg.mxu0
    %778 = vst [vmem:[#allocation10] sm:$0xff] %v716
    %779 = vst [vmem:[#allocation10 + $0x8] sm:$0xff] %v719
    %780 = vst [vmem:[#allocation10 + $0x10] sm:$0xff] %v724
    %781 = vst [vmem:[#allocation10 + $0x18] sm:$0xff] %v727
    %782 = vst [vmem:[#allocation10 + $0x20] sm:$0xff] %v732
    %783 = vst [vmem:[#allocation10 + $0x28] sm:$0xff] %v735
    %784 = vst [vmem:[#allocation10 + $0x30] sm:$0xff] %v740
    %785 = vst [vmem:[#allocation10 + $0x38] sm:$0xff] %v743
    %786 = vst [vmem:[#allocation10 + $0x40] sm:$0xff] %v748
    %787 = vst [vmem:[#allocation10 + $0x48] sm:$0xff] %v751
    %788 = vst [vmem:[#allocation10 + $0x50] sm:$0xff] %v756
    %789 = vst [vmem:[#allocation10 + $0x58] sm:$0xff] %v759
    %790 = vst [vmem:[#allocation10 + $0x60] sm:$0xff] %v764
    %791 = vst [vmem:[#allocation10 + $0x68] sm:$0xff] %v767
    %792 = vst [vmem:[#allocation10 + $0x70] sm:$0xff] %v772
    %793 = vst [vmem:[#allocation10 + $0x78] sm:$0xff] %v775
    // Predicated region
    $region42: #{tpu_custom_call.1} parent=1 // pred_check
      _
    $region43: #{tpu_custom_call.1} parent=1 // pred_check_branch
      %795 = sbr.rel (0) target = $region45
    $region44: #{tpu_custom_call.1} parent=1 // pred_region
      %s797 = ssub.s32 2048, 2048
      %798 = vsyncadd [#allocation4], %s797
      %s799 = sshll.u32 [#allocation10], 4
      %s800 = int_to_ptr.vmem [resolvable:$true] %s799
      %805 = dma.vmem_to_hbm [thread:$0]  %s800, 2048, %s6, [#allocation4], 128, 128, 8
    $region45: #{tpu_custom_call.1} parent=1 // pred_fallthru
      _
    // Predicated region
    $region46: #{tpu_custom_call.1} parent=1 // pred_check
      _
    $region47: #{tpu_custom_call.1} parent=1 // pred_check_branch
      %807 = sbr.rel (0) target = $region49
    $region48: #{tpu_custom_call.1} parent=1 // pred_region
      %808 = dma.done [#allocation4], 2048
    $region49: #{tpu_custom_call.1} parent=1 // pred_fallthru
      _
    %809 = vsyncpa [#allocation3], 1
    %810 = vsyncpa [#allocation6], 1
    %811 = vsyncpa [#allocation9], 1
    %812 = vsyncpa [#allocation4], 1

</llo_original>
